<compile_context>
chip_gen: v6e
topology: v6e:2x2x1
jax: 0.10.0
libtpu: 0.0.40
codegen_flags: <defaults>
</compile_context>

<pallas_src>
import jax
import jax.numpy as jnp
from jax.experimental import pallas as pl
from jax.experimental.pallas import tpu as pltpu


def autoencoder_kernel(x_ref, w_enc_ref, b_enc_ref, w_dec_ref, b_dec_ref, o_ref):
    # x tile arrives in f32; cast to bf16 on the VPU for the MXU matmuls,
    # accumulate in f32.
    x = x_ref[...].astype(jnp.bfloat16)                       # (TM, D) bf16
    # Encoder: h = relu(x @ W_enc + b_enc)
    h = jnp.dot(x, w_enc_ref[...],
                preferred_element_type=jnp.float32)           # (TM, Hp) f32
    h = jnp.maximum(h + b_enc_ref[...], 0.0)                  # f32 epilogue
    # Decoder: y = h @ W_dec + b_dec
    y = jnp.dot(h.astype(jnp.bfloat16), w_dec_ref[...],
                preferred_element_type=jnp.float32)           # (TM, D) f32
    o_ref[...] = (y + b_dec_ref[...]).astype(o_ref.dtype)     # bf16 store


def _round_up(a, b):
    return ((a + b - 1) // b) * b


def _choose_tm(n_pad8, tm_cap):
    """Largest multiple of 8 that divides n_pad8 and is <= tm_cap."""
    best = 8
    t = 8
    limit = min(n_pad8, max(tm_cap, 8))
    while t <= limit:
        if n_pad8 % t == 0:
            best = t
        t += 8
    return best


def autoencoder_forward(x_nchw, w_enc, b_enc, w_dec, b_dec):
    """x_nchw: (N, C, H, W) float32. Returns bf16 reconstruction, same shape."""
    n, c, h, w = x_nchw.shape
    d = c * h * w
    hidden = w_enc.shape[1]

    # Lane-dense hidden: zero-pad hidden up to a multiple of 128 so h and the
    # decoder contraction use full 128-lane vregs.  Zero encoder columns give
    # relu(0)=0 activations which hit zero decoder rows -> mathematically inert.
    hidden_p = max(128, _round_up(hidden, 128))
    hp = hidden_p - hidden
    w_enc_b = jnp.pad(w_enc.astype(jnp.bfloat16), ((0, 0), (0, hp)))
    b_enc_f = jnp.pad(b_enc.astype(jnp.float32), ((0, 0), (0, hp)))
    w_dec_b = jnp.pad(w_dec.astype(jnp.bfloat16), ((0, hp), (0, 0)))
    b_dec_f = b_dec.astype(jnp.float32)

    # x stays f32; reshape is free (contiguous). bf16 cast happens in-kernel.
    x2d = x_nchw.reshape(n, d)

    # Pad batch only to a sublane multiple (waste < 8 rows for any N).
    n_pad8 = _round_up(n, 8)
    if n_pad8 != n:
        x2d = jnp.pad(x2d, ((0, n_pad8 - n), (0, 0)))

    # Tile the batch: big tiles for DMA efficiency, but keep >=2 tiles when
    # possible so the parallel axis can split across the 2 v7x TensorCores.
    tm_cap = 512
    if n_pad8 >= 16:
        tm_cap = min(tm_cap, (n_pad8 // 2) // 8 * 8)
    tm = _choose_tm(n_pad8, tm_cap)
    grid_m = n_pad8 // tm

    # Advisory cost estimate over the real (unpadded) workload.
    flops = 2 * n * d * hidden * 2  # two matmuls
    bytes_accessed = (
        n * d * 4               # f32 input
        + n * d * 2             # bf16 output
        + w_enc_b.size * 2 + w_dec_b.size * 2
        + b_enc_f.size * 4 + b_dec_f.size * 4
    )

    out2d = pl.pallas_call(
        autoencoder_kernel,
        out_shape=jax.ShapeDtypeStruct((n_pad8, d), jnp.bfloat16),
        grid=(grid_m,),
        in_specs=[
            pl.BlockSpec((tm, d), lambda i: (i, 0)),           # x tile (pipelined)
            pl.BlockSpec((d, hidden_p), lambda i: (0, 0)),     # W_enc (resident)
            pl.BlockSpec((1, hidden_p), lambda i: (0, 0)),     # b_enc (resident)
            pl.BlockSpec((hidden_p, d), lambda i: (0, 0)),     # W_dec (resident)
            pl.BlockSpec((1, d), lambda i: (0, 0)),            # b_dec (resident)
        ],
        out_specs=pl.BlockSpec((tm, d), lambda i: (i, 0)),
        compiler_params=pltpu.CompilerParams(
            dimension_semantics=("parallel",)),
        cost_estimate=pl.CostEstimate(
            flops=flops, transcendentals=0, bytes_accessed=bytes_accessed),
    )(x2d, w_enc_b, b_enc_f, w_dec_b, b_dec_f)

    return out2d[:n].reshape(n, c, h, w)


def init_params(key, d, hidden):
    """Deterministic parameter init (matches nn.Linear shapes, stored transposed)."""
    k1, k2, k3, k4 = jax.random.split(key, 4)
    # nn.Linear(d, hidden): weight (hidden, d), bias (hidden,) -> stored as (d, hidden)
    w_enc = jax.random.normal(k1, (d, hidden), jnp.float32) * (1.0 / jnp.sqrt(d))
    b_enc = jax.random.normal(k2, (1, hidden), jnp.float32) * 0.01
    # nn.Linear(hidden, d): weight (d, hidden), bias (d,) -> stored as (hidden, d)
    w_dec = jax.random.normal(k3, (hidden, d), jnp.float32) * (1.0 / jnp.sqrt(hidden))
    b_dec = jax.random.normal(k4, (1, d), jnp.float32) * 0.01
    return w_enc, b_enc, w_dec, b_dec


if __name__ == "__main__":
    key = jax.random.PRNGKey(0)
    kx, kp = jax.random.split(key)

    # Small shapes consistent with an image autoencoder forward.
    N, C, H, W = 2, 4, 16, 16
    D = C * H * W          # 1024
    HIDDEN = 32

    x = jax.random.normal(kx, (N, C, H, W), jnp.float32)
    w_enc, b_enc, w_dec, b_dec = init_params(kp, D, HIDDEN)

    y = autoencoder_forward(x, w_enc, b_enc, w_dec, b_dec)
    y = jax.block_until_ready(y)

    # Reference with the same bf16 weight/activation casts, f32 accumulation,
    # and bf16 final output.
    x2d = x.reshape(N, D).astype(jnp.bfloat16)
    w_enc_b = w_enc.astype(jnp.bfloat16)
    w_dec_b = w_dec.astype(jnp.bfloat16)
    h_ref = jnp.maximum(
        jnp.dot(x2d, w_enc_b, preferred_element_type=jnp.float32) + b_enc, 0.0)
    ref = (jnp.dot(h_ref.astype(jnp.bfloat16), w_dec_b,
                   preferred_element_type=jnp.float32) + b_dec)
    ref = ref.astype(jnp.bfloat16).reshape(N, C, H, W)

    assert y.shape == (N, C, H, W)
    assert y.dtype == jnp.bfloat16
    assert jnp.allclose(y.astype(jnp.float32), ref.astype(jnp.float32),
                        atol=5e-2, rtol=5e-2)

    print("KERNEL_OK")
</pallas_src>

<mosaic_0001>
module attributes {stable_mosaic.version = 11 : i64} {
  func.func @autoencoder_kernel(%arg0: i32, %arg1: memref<8x1024xf32, #tpu.memory_space<vmem>>, %arg2: memref<1024x128xbf16, #tpu.memory_space<vmem>>, %arg3: memref<1x128xf32, #tpu.memory_space<vmem>>, %arg4: memref<128x1024xbf16, #tpu.memory_space<vmem>>, %arg5: memref<1x1024xf32, #tpu.memory_space<vmem>>, %arg6: memref<8x1024xbf16, #tpu.memory_space<vmem>>) attributes {dimension_semantics = [#tpu.dimension_semantics<parallel>], iteration_bounds = array<i64: 1>, scalar_prefetch = 0 : i64, scratch_operands = 0 : i64, tpu.core_type = #tpu.core_type<tc>, window_params = [{transform_indices = @transform_0, window_bounds = array<i64: 8, 1024>}, {pipeline_mode = #tpu.pipeline_mode<synchronous>, transform_indices = @transform_1, window_bounds = array<i64: 1024, 128>}, {pipeline_mode = #tpu.pipeline_mode<synchronous>, transform_indices = @transform_2, window_bounds = array<i64: 1, 128>}, {pipeline_mode = #tpu.pipeline_mode<synchronous>, transform_indices = @transform_3, window_bounds = array<i64: 128, 1024>}, {pipeline_mode = #tpu.pipeline_mode<synchronous>, transform_indices = @transform_4, window_bounds = array<i64: 1, 1024>}, {transform_indices = @transform_5, window_bounds = array<i64: 8, 1024>}]} {
    %c0 = arith.constant 0 : index
    %c0_0 = arith.constant 0 : index
    %0 = vector.load %arg1[%c0, %c0_0] : memref<8x1024xf32, #tpu.memory_space<vmem>>, vector<8x1024xf32>
    %1 = arith.truncf %0 : vector<8x1024xf32> to vector<8x1024xbf16>
    %c0_1 = arith.constant 0 : index
    %c0_2 = arith.constant 0 : index
    %2 = vector.load %arg2[%c0_1, %c0_2] : memref<1024x128xbf16, #tpu.memory_space<vmem>>, vector<1024x128xbf16>
    %cst = arith.constant dense<0.000000e+00> : vector<8x128xf32>
    %3 = tpu.matmul %1, %2, %cst {dimension_numbers = #tpu.dot_dimension_numbers<[1], [0], [0], [1], [0, 0, 1, 1], [], []>} : vector<8x1024xbf16>, vector<1024x128xbf16>, vector<8x128xf32> -> vector<8x128xf32>
    %c0_3 = arith.constant 0 : index
    %c0_4 = arith.constant 0 : index
    %4 = vector.load %arg3[%c0_3, %c0_4] : memref<1x128xf32, #tpu.memory_space<vmem>>, vector<1x128xf32>
    %5 = vector.broadcast %4 : vector<1x128xf32> to vector<8x128xf32>
    %6 = arith.addf %3, %5 : vector<8x128xf32>
    %cst_5 = arith.constant 0.000000e+00 : f32
    %7 = vector.broadcast %cst_5 : f32 to vector<8x128xf32>
    %8 = arith.maximumf %6, %7 : vector<8x128xf32>
    %9 = arith.truncf %8 : vector<8x128xf32> to vector<8x128xbf16>
    %c0_6 = arith.constant 0 : index
    %c0_7 = arith.constant 0 : index
    %10 = vector.load %arg4[%c0_6, %c0_7] : memref<128x1024xbf16, #tpu.memory_space<vmem>>, vector<128x1024xbf16>
    %cst_8 = arith.constant dense<0.000000e+00> : vector<8x1024xf32>
    %11 = tpu.matmul %9, %10, %cst_8 {dimension_numbers = #tpu.dot_dimension_numbers<[1], [0], [0], [1], [0, 0, 1, 1], [], []>} : vector<8x128xbf16>, vector<128x1024xbf16>, vector<8x1024xf32> -> vector<8x1024xf32>
    %c0_9 = arith.constant 0 : index
    %c0_10 = arith.constant 0 : index
    %12 = vector.load %arg5[%c0_9, %c0_10] : memref<1x1024xf32, #tpu.memory_space<vmem>>, vector<1x1024xf32>
    %13 = vector.broadcast %12 : vector<1x1024xf32> to vector<8x1024xf32>
    %14 = arith.addf %11, %13 : vector<8x1024xf32>
    %15 = arith.truncf %14 : vector<8x1024xf32> to vector<8x1024xbf16>
    %c0_11 = arith.constant 0 : index
    %c0_12 = arith.constant 0 : index
    %16 = vector.load %arg6[%c0_11, %c0_12] : memref<8x1024xbf16, #tpu.memory_space<vmem>>, vector<8x1024xbf16>
    tpu.vector_store %arg6[%c0_11, %c0_12], %15 {strides = array<i32>} : memref<8x1024xbf16, #tpu.memory_space<vmem>>, vector<8x1024xbf16>,
    return
  }
  func.func @transform_0(%arg0: i32) -> (i32, i32) {
    %c0_i32 = arith.constant 0 : i32
    %c0_i32_0 = arith.constant 0 : i32
    return %arg0, %c0_i32 : i32, i32
  }
  func.func @transform_1(%arg0: i32) -> (i32, i32) {
    %c0_i32 = arith.constant 0 : i32
    %c0_i32_0 = arith.constant 0 : i32
    %c0_i32_1 = arith.constant 0 : i32
    return %c0_i32, %c0_i32_0 : i32, i32
  }
  func.func @transform_2(%arg0: i32) -> (i32, i32) {
    %c0_i32 = arith.constant 0 : i32
    %c0_i32_0 = arith.constant 0 : i32
    %c0_i32_1 = arith.constant 0 : i32
    return %c0_i32, %c0_i32_0 : i32, i32
  }
  func.func @transform_3(%arg0: i32) -> (i32, i32) {
    %c0_i32 = arith.constant 0 : i32
    %c0_i32_0 = arith.constant 0 : i32
    %c0_i32_1 = arith.constant 0 : i32
    return %c0_i32, %c0_i32_0 : i32, i32
  }
  func.func @transform_4(%arg0: i32) -> (i32, i32) {
    %c0_i32 = arith.constant 0 : i32
    %c0_i32_0 = arith.constant 0 : i32
    %c0_i32_1 = arith.constant 0 : i32
    return %c0_i32, %c0_i32_0 : i32, i32
  }
  func.func @transform_5(%arg0: i32) -> (i32, i32) {
    %c0_i32 = arith.constant 0 : i32
    %c0_i32_0 = arith.constant 0 : i32
    return %arg0, %c0_i32 : i32, i32
  }
}

</mosaic_0001>

<llo_original>
// kernel: tpu_custom_call.1
$region0: #{tpu_custom_call.1}
  #allocation0 [shape = 'u32[]', space=smem, size = 0x4, offset = 0x4, fixed_abs, tag = 'smem constant byte address 0x4 - core index']
  #allocation1 [shape = 'u32[144,128]{1,0:T(1,128)}', space=vmem, size = 0x12000, scoped, tag = 'internal scratch']
  %s0 = inlined_call_operand.hbm [shape: f32[8,1024], index: 0, kind: input, shape index: {}]
  %s1 = inlined_call_operand.hbm [shape: bf16[1024,128], index: 1, kind: input, shape index: {}]
  %s2 = inlined_call_operand.vmem [shape: f32[1,128], index: 2, kind: input, shape index: {}]
  %s3 = inlined_call_operand.hbm [shape: bf16[128,1024], index: 3, kind: input, shape index: {}]
  %s4 = inlined_call_operand.hbm [shape: f32[1,1024], index: 4, kind: input, shape index: {}]
  %s5 = inlined_call_operand.hbm [shape: bf16[8,1024], index: 5, kind: output, shape index: {}]
  %s6 = sld [smem:[#allocation0]]
  $region46: #{tpu_custom_call.1} parent=0
    _
  %s8 = ssub.s32 1, %s6
  %s9 = scalar_select 0, %s8, %s6
  $region1: #{tpu_custom_call.1} parent=0
    #allocation2 [shape = 'u8[32768]{0}', space=vmem, size = 0x8000, scoped, tag = 'input window, operand 0, single buffered']
    #allocation3 [shape = 's32[1]{0}', space=sflag, size = 0x4, scoped, tag = 'scoped memory for tpu_custom_call.1']
    #allocation4 [shape = 's32[1]{0}', space=sflag, size = 0x4, scoped, tag = 'scoped memory for tpu_custom_call.1']
    #allocation5 [shape = 'u8[262144]{0}', space=vmem, size = 0x40000, scoped, tag = 'input window, operand 1, single buffered']
    #allocation6 [shape = 's32[1]{0}', space=sflag, size = 0x4, scoped, tag = 'scoped memory for tpu_custom_call.1']
    #allocation7 [shape = 'u8[262144]{0}', space=vmem, size = 0x40000, scoped, tag = 'input window, operand 3, single buffered']
    #allocation8 [shape = 'u8[4096]{0}', space=vmem, size = 0x1000, scoped, tag = 'input window, operand 4, single buffered']
    #allocation9 [shape = 's32[1]{0}', space=sflag, size = 0x4, scoped, tag = 'scoped memory for tpu_custom_call.1']
    #allocation10 [shape = 'u8[16384]{0}', space=vmem, size = 0x4000, scoped, tag = 'output window, operand 0, single buffered']
    %10 = vsyncpa [#allocation3], 0
    %11 = vsyncpa [#allocation6], 0
    %12 = vsyncpa [#allocation9], 0
    %13 = vsyncpa [#allocation4], 0
    // Predicated region
    $region2: #{tpu_custom_call.1} parent=1 // pred_check
      _
    $region3: #{tpu_custom_call.1} parent=1 // pred_check_branch
      %15 = sbr.rel (0) target = $region5
    $region4: #{tpu_custom_call.1} parent=1 // pred_region
      %s17 = ssub.s32 1024, 1024
      %18 = vsyncadd [#allocation3], %s17
      %s20 = sshll.u32 [#allocation2], 4
      %s21 = int_to_ptr.vmem [resolvable:$true] %s20
      %23 = dma.hbm_to_vmem [thread:$0]  %s0, 1024, %s21, [#allocation3]
    $region5: #{tpu_custom_call.1} parent=1 // pred_fallthru
      _
    // Predicated region
    $region6: #{tpu_custom_call.1} parent=1 // pred_check
      _
    $region7: #{tpu_custom_call.1} parent=1 // pred_check_branch
      %25 = sbr.rel (0) target = $region9
    $region8: #{tpu_custom_call.1} parent=1 // pred_region
      %s27 = ssub.s32 8192, 8192
      %28 = vsyncadd [#allocation6], %s27
      %s29 = sshll.u32 [#allocation5], 4
      %s30 = int_to_ptr.vmem [resolvable:$true] %s29
      %35 = dma.hbm_to_vmem [thread:$0]  %s1, 8192, %s30, [#allocation6], 64, 64, 4
    $region9: #{tpu_custom_call.1} parent=1 // pred_fallthru
      _
    // Predicated region
    $region10: #{tpu_custom_call.1} parent=1 // pred_check
      _
    $region11: #{tpu_custom_call.1} parent=1 // pred_check_branch
      %37 = sbr.rel (0) target = $region13
    $region12: #{tpu_custom_call.1} parent=1 // pred_region
      _
    $region13: #{tpu_custom_call.1} parent=1 // pred_fallthru
      _
    // Predicated region
    $region14: #{tpu_custom_call.1} parent=1 // pred_check
      _
    $region15: #{tpu_custom_call.1} parent=1 // pred_check_branch
      %39 = sbr.rel (0) target = $region17
    $region16: #{tpu_custom_call.1} parent=1 // pred_region
      %s41 = ssub.s32 8192, 8192
      %42 = vsyncadd [#allocation6], %s41
      %s43 = sshll.u32 [#allocation7], 4
      %s44 = int_to_ptr.vmem [resolvable:$true] %s43
      %49 = dma.hbm_to_vmem [thread:$0]  %s3, 8192, %s44, [#allocation6], 512, 512, 32
    $region17: #{tpu_custom_call.1} parent=1 // pred_fallthru
      _
    // Predicated region
    $region18: #{tpu_custom_call.1} parent=1 // pred_check
      _
    $region19: #{tpu_custom_call.1} parent=1 // pred_check_branch
      %51 = sbr.rel (0) target = $region21
    $region20: #{tpu_custom_call.1} parent=1 // pred_region
      %s53 = ssub.s32 128, 128
      %54 = vsyncadd [#allocation9], %s53
      %s56 = sshll.u32 [#allocation8], 4
      %s57 = int_to_ptr.vmem [resolvable:$true] %s56
      %59 = dma.hbm_to_vmem [thread:$0]  %s4, 128, %s57, [#allocation9]
    $region21: #{tpu_custom_call.1} parent=1 // pred_fallthru
      _
    // Predicated region
    $region22: #{tpu_custom_call.1} parent=1 // pred_check
      _
    $region23: #{tpu_custom_call.1} parent=1 // pred_check_branch
      %61 = sbr.rel (0) target = $region25
    $region24: #{tpu_custom_call.1} parent=1 // pred_region
      %62 = dma.done [#allocation3], 1024
    $region25: #{tpu_custom_call.1} parent=1 // pred_fallthru
      _
    // Predicated region
    $region26: #{tpu_custom_call.1} parent=1 // pred_check
      _
    $region27: #{tpu_custom_call.1} parent=1 // pred_check_branch
      %64 = sbr.rel (0) target = $region29
    $region28: #{tpu_custom_call.1} parent=1 // pred_region
      %65 = dma.done [#allocation6], 8192
    $region29: #{tpu_custom_call.1} parent=1 // pred_fallthru
      _
    // Predicated region
    $region30: #{tpu_custom_call.1} parent=1 // pred_check
      _
    $region31: #{tpu_custom_call.1} parent=1 // pred_check_branch
      %67 = sbr.rel (0) target = $region33
    $region32: #{tpu_custom_call.1} parent=1 // pred_region
      %68 = dma.done [#allocation6], 8192
    $region33: #{tpu_custom_call.1} parent=1 // pred_fallthru
      _
    // Predicated region
    $region34: #{tpu_custom_call.1} parent=1 // pred_check
      _
    $region35: #{tpu_custom_call.1} parent=1 // pred_check_branch
      %70 = sbr.rel (0) target = $region37
    $region36: #{tpu_custom_call.1} parent=1 // pred_region
      %71 = dma.done [#allocation9], 128
    $region37: #{tpu_custom_call.1} parent=1 // pred_fallthru
      _
    %v73 = vld [vmem:[#allocation2] sm:$0xff]
    %v74 = vld [vmem:[#allocation2 + $0x8] sm:$0xff]
    %v75 = vld [vmem:[#allocation2 + $0x10] sm:$0xff]
    %v76 = vld [vmem:[#allocation2 + $0x18] sm:$0xff]
    %v77 = vld [vmem:[#allocation2 + $0x20] sm:$0xff]
    %v78 = vld [vmem:[#allocation2 + $0x28] sm:$0xff]
    %v79 = vld [vmem:[#allocation2 + $0x30] sm:$0xff]
    %v80 = vld [vmem:[#allocation2 + $0x38] sm:$0xff]
    %v81 = vpack.c.bf16 %v73, %v73
    %v82 = vpack.c.bf16 %v74, %v74
    %v83 = vpack.c.bf16 %v75, %v75
    %v84 = vpack.c.bf16 %v76, %v76
    %v85 = vpack.c.bf16 %v77, %v77
    %v86 = vpack.c.bf16 %v78, %v78
    %v87 = vpack.c.bf16 %v79, %v79
    %v88 = vpack.c.bf16 %v80, %v80
    %v89 = vld [vmem:[#allocation5] sm:$0xf]
    %v90 = vld [vmem:[#allocation5 + $0x4] sm:$0xf]
    %v91 = vld [vmem:[#allocation5 + $0x8] sm:$0xf]
    %v92 = vld [vmem:[#allocation5 + $0xc] sm:$0xf]
    %v93 = vld [vmem:[#allocation5 + $0x10] sm:$0xf]
    %v94 = vld [vmem:[#allocation5 + $0x14] sm:$0xf]
    %v95 = vld [vmem:[#allocation5 + $0x18] sm:$0xf]
    %v96 = vld [vmem:[#allocation5 + $0x1c] sm:$0xf]
    %v97 = vld [vmem:[#allocation5 + $0x20] sm:$0xf]
    %v98 = vld [vmem:[#allocation5 + $0x24] sm:$0xf]
    %v99 = vld [vmem:[#allocation5 + $0x28] sm:$0xf]
    %v100 = vld [vmem:[#allocation5 + $0x2c] sm:$0xf]
    %v101 = vld [vmem:[#allocation5 + $0x30] sm:$0xf]
    %v102 = vld [vmem:[#allocation5 + $0x34] sm:$0xf]
    %v103 = vld [vmem:[#allocation5 + $0x38] sm:$0xf]
    %v104 = vld [vmem:[#allocation5 + $0x3c] sm:$0xf]
    %v105 = vld [vmem:[#allocation5 + $0x40] sm:$0xf]
    %v106 = vld [vmem:[#allocation5 + $0x44] sm:$0xf]
    %v107 = vld [vmem:[#allocation5 + $0x48] sm:$0xf]
    %v108 = vld [vmem:[#allocation5 + $0x4c] sm:$0xf]
    %v109 = vld [vmem:[#allocation5 + $0x50] sm:$0xf]
    %v110 = vld [vmem:[#allocation5 + $0x54] sm:$0xf]
    %v111 = vld [vmem:[#allocation5 + $0x58] sm:$0xf]
    %v112 = vld [vmem:[#allocation5 + $0x5c] sm:$0xf]
    %v113 = vld [vmem:[#allocation5 + $0x60] sm:$0xf]
    %v114 = vld [vmem:[#allocation5 + $0x64] sm:$0xf]
    %v115 = vld [vmem:[#allocation5 + $0x68] sm:$0xf]
    %v116 = vld [vmem:[#allocation5 + $0x6c] sm:$0xf]
    %v117 = vld [vmem:[#allocation5 + $0x70] sm:$0xf]
    %v118 = vld [vmem:[#allocation5 + $0x74] sm:$0xf]
    %v119 = vld [vmem:[#allocation5 + $0x78] sm:$0xf]
    %v120 = vld [vmem:[#allocation5 + $0x7c] sm:$0xf]
    %v121 = vld [vmem:[#allocation5 + $0x80] sm:$0xf]
    %v122 = vld [vmem:[#allocation5 + $0x84] sm:$0xf]
    %v123 = vld [vmem:[#allocation5 + $0x88] sm:$0xf]
    %v124 = vld [vmem:[#allocation5 + $0x8c] sm:$0xf]
    %v125 = vld [vmem:[#allocation5 + $0x90] sm:$0xf]
    %v126 = vld [vmem:[#allocation5 + $0x94] sm:$0xf]
    %v127 = vld [vmem:[#allocation5 + $0x98] sm:$0xf]
    %v128 = vld [vmem:[#allocation5 + $0x9c] sm:$0xf]
    %v129 = vld [vmem:[#allocation5 + $0xa0] sm:$0xf]
    %v130 = vld [vmem:[#allocation5 + $0xa4] sm:$0xf]
    %v131 = vld [vmem:[#allocation5 + $0xa8] sm:$0xf]
    %v132 = vld [vmem:[#allocation5 + $0xac] sm:$0xf]
    %v133 = vld [vmem:[#allocation5 + $0xb0] sm:$0xf]
    %v134 = vld [vmem:[#allocation5 + $0xb4] sm:$0xf]
    %v135 = vld [vmem:[#allocation5 + $0xb8] sm:$0xf]
    %v136 = vld [vmem:[#allocation5 + $0xbc] sm:$0xf]
    %v137 = vld [vmem:[#allocation5 + $0xc0] sm:$0xf]
    %v138 = vld [vmem:[#allocation5 + $0xc4] sm:$0xf]
    %v139 = vld [vmem:[#allocation5 + $0xc8] sm:$0xf]
    %v140 = vld [vmem:[#allocation5 + $0xcc] sm:$0xf]
    %v141 = vld [vmem:[#allocation5 + $0xd0] sm:$0xf]
    %v142 = vld [vmem:[#allocation5 + $0xd4] sm:$0xf]
    %v143 = vld [vmem:[#allocation5 + $0xd8] sm:$0xf]
    %v144 = vld [vmem:[#allocation5 + $0xdc] sm:$0xf]
    %v145 = vld [vmem:[#allocation5 + $0xe0] sm:$0xf]
    %v146 = vld [vmem:[#allocation5 + $0xe4] sm:$0xf]
    %v147 = vld [vmem:[#allocation5 + $0xe8] sm:$0xf]
    %v148 = vld [vmem:[#allocation5 + $0xec] sm:$0xf]
    %v149 = vld [vmem:[#allocation5 + $0xf0] sm:$0xf]
    %v150 = vld [vmem:[#allocation5 + $0xf4] sm:$0xf]
    %v151 = vld [vmem:[#allocation5 + $0xf8] sm:$0xf]
    %v152 = vld [vmem:[#allocation5 + $0xfc] sm:$0xf]
    %v153 = vld [vmem:[#allocation5 + $0x100] sm:$0xf]
    %v154 = vld [vmem:[#allocation5 + $0x104] sm:$0xf]
    %v155 = vld [vmem:[#allocation5 + $0x108] sm:$0xf]
    %v156 = vld [vmem:[#allocation5 + $0x10c] sm:$0xf]
    %v157 = vld [vmem:[#allocation5 + $0x110] sm:$0xf]
    %v158 = vld [vmem:[#allocation5 + $0x114] sm:$0xf]
    %v159 = vld [vmem:[#allocation5 + $0x118] sm:$0xf]
    %v160 = vld [vmem:[#allocation5 + $0x11c] sm:$0xf]
    %v161 = vld [vmem:[#allocation5 + $0x120] sm:$0xf]
    %v162 = vld [vmem:[#allocation5 + $0x124] sm:$0xf]
    %v163 = vld [vmem:[#allocation5 + $0x128] sm:$0xf]
    %v164 = vld [vmem:[#allocation5 + $0x12c] sm:$0xf]
    %v165 = vld [vmem:[#allocation5 + $0x130] sm:$0xf]
    %v166 = vld [vmem:[#allocation5 + $0x134] sm:$0xf]
    %v167 = vld [vmem:[#allocation5 + $0x138] sm:$0xf]
    %v168 = vld [vmem:[#allocation5 + $0x13c] sm:$0xf]
    %v169 = vld [vmem:[#allocation5 + $0x140] sm:$0xf]
    %v170 = vld [vmem:[#allocation5 + $0x144] sm:$0xf]
    %v171 = vld [vmem:[#allocation5 + $0x148] sm:$0xf]
    %v172 = vld [vmem:[#allocation5 + $0x14c] sm:$0xf]
    %v173 = vld [vmem:[#allocation5 + $0x150] sm:$0xf]
    %v174 = vld [vmem:[#allocation5 + $0x154] sm:$0xf]
    %v175 = vld [vmem:[#allocation5 + $0x158] sm:$0xf]
    %v176 = vld [vmem:[#allocation5 + $0x15c] sm:$0xf]
    %v177 = vld [vmem:[#allocation5 + $0x160] sm:$0xf]
    %v178 = vld [vmem:[#allocation5 + $0x164] sm:$0xf]
    %v179 = vld [vmem:[#allocation5 + $0x168] sm:$0xf]
    %v180 = vld [vmem:[#allocation5 + $0x16c] sm:$0xf]
    %v181 = vld [vmem:[#allocation5 + $0x170] sm:$0xf]
    %v182 = vld [vmem:[#allocation5 + $0x174] sm:$0xf]
    %v183 = vld [vmem:[#allocation5 + $0x178] sm:$0xf]
    %v184 = vld [vmem:[#allocation5 + $0x17c] sm:$0xf]
    %v185 = vld [vmem:[#allocation5 + $0x180] sm:$0xf]
    %v186 = vld [vmem:[#allocation5 + $0x184] sm:$0xf]
    %v187 = vld [vmem:[#allocation5 + $0x188] sm:$0xf]
    %v188 = vld [vmem:[#allocation5 + $0x18c] sm:$0xf]
    %v189 = vld [vmem:[#allocation5 + $0x190] sm:$0xf]
    %v190 = vld [vmem:[#allocation5 + $0x194] sm:$0xf]
    %v191 = vld [vmem:[#allocation5 + $0x198] sm:$0xf]
    %v192 = vld [vmem:[#allocation5 + $0x19c] sm:$0xf]
    %v193 = vld [vmem:[#allocation5 + $0x1a0] sm:$0xf]
    %v194 = vld [vmem:[#allocation5 + $0x1a4] sm:$0xf]
    %v195 = vld [vmem:[#allocation5 + $0x1a8] sm:$0xf]
    %v196 = vld [vmem:[#allocation5 + $0x1ac] sm:$0xf]
    %v197 = vld [vmem:[#allocation5 + $0x1b0] sm:$0xf]
    %v198 = vld [vmem:[#allocation5 + $0x1b4] sm:$0xf]
    %v199 = vld [vmem:[#allocation5 + $0x1b8] sm:$0xf]
    %v200 = vld [vmem:[#allocation5 + $0x1bc] sm:$0xf]
    %v201 = vld [vmem:[#allocation5 + $0x1c0] sm:$0xf]
    %v202 = vld [vmem:[#allocation5 + $0x1c4] sm:$0xf]
    %v203 = vld [vmem:[#allocation5 + $0x1c8] sm:$0xf]
    %v204 = vld [vmem:[#allocation5 + $0x1cc] sm:$0xf]
    %v205 = vld [vmem:[#allocation5 + $0x1d0] sm:$0xf]
    %v206 = vld [vmem:[#allocation5 + $0x1d4] sm:$0xf]
    %v207 = vld [vmem:[#allocation5 + $0x1d8] sm:$0xf]
    %v208 = vld [vmem:[#allocation5 + $0x1dc] sm:$0xf]
    %v209 = vld [vmem:[#allocation5 + $0x1e0] sm:$0xf]
    %v210 = vld [vmem:[#allocation5 + $0x1e4] sm:$0xf]
    %v211 = vld [vmem:[#allocation5 + $0x1e8] sm:$0xf]
    %v212 = vld [vmem:[#allocation5 + $0x1ec] sm:$0xf]
    %v213 = vld [vmem:[#allocation5 + $0x1f0] sm:$0xf]
    %v214 = vld [vmem:[#allocation5 + $0x1f4] sm:$0xf]
    %v215 = vld [vmem:[#allocation5 + $0x1f8] sm:$0xf]
    %v216 = vld [vmem:[#allocation5 + $0x1fc] sm:$0xf]
    %v217 = vld [vmem:[%s2] sm:$0x1]
    %v219 = vlaneseq
    %v220 = vshrl.u32 %v219, 7
    %v221 = vsub.s32 0, %v220
    %v222 = vrot.slane %v217, %v221
    %v352 = vunpack.c.l.b16 %v89
    %v353 = vunpack.c.l.b16 %v90
    %v354 = vunpack.c.l.b16 %v91
    %v355 = vunpack.c.l.b16 %v92
    %v356 = vunpack.c.l.b16 %v93
    %v357 = vunpack.c.l.b16 %v94
    %v358 = vunpack.c.l.b16 %v95
    %v359 = vunpack.c.l.b16 %v96
    %v360 = vunpack.c.l.b16 %v97
    %v361 = vunpack.c.l.b16 %v98
    %v362 = vunpack.c.l.b16 %v99
    %v363 = vunpack.c.l.b16 %v100
    %v364 = vunpack.c.l.b16 %v101
    %v365 = vunpack.c.l.b16 %v102
    %v366 = vunpack.c.l.b16 %v103
    %v367 = vunpack.c.l.b16 %v104
    %v368 = vunpack.c.l.b16 %v105
    %v369 = vunpack.c.l.b16 %v106
    %v370 = vunpack.c.l.b16 %v107
    %v371 = vunpack.c.l.b16 %v108
    %v372 = vunpack.c.l.b16 %v109
    %v373 = vunpack.c.l.b16 %v110
    %v374 = vunpack.c.l.b16 %v111
    %v375 = vunpack.c.l.b16 %v112
    %v376 = vunpack.c.l.b16 %v113
    %v377 = vunpack.c.l.b16 %v114
    %v378 = vunpack.c.l.b16 %v115
    %v379 = vunpack.c.l.b16 %v116
    %v380 = vunpack.c.l.b16 %v117
    %v381 = vunpack.c.l.b16 %v118
    %v382 = vunpack.c.l.b16 %v119
    %v383 = vunpack.c.l.b16 %v120
    %v384 = vunpack.c.l.b16 %v121
    %v385 = vunpack.c.l.b16 %v122
    %v386 = vunpack.c.l.b16 %v123
    %v387 = vunpack.c.l.b16 %v124
    %v388 = vunpack.c.l.b16 %v125
    %v389 = vunpack.c.l.b16 %v126
    %v390 = vunpack.c.l.b16 %v127
    %v391 = vunpack.c.l.b16 %v128
    %v392 = vunpack.c.l.b16 %v129
    %v393 = vunpack.c.l.b16 %v130
    %v394 = vunpack.c.l.b16 %v131
    %v395 = vunpack.c.l.b16 %v132
    %v396 = vunpack.c.l.b16 %v133
    %v397 = vunpack.c.l.b16 %v134
    %v398 = vunpack.c.l.b16 %v135
    %v399 = vunpack.c.l.b16 %v136
    %v400 = vunpack.c.l.b16 %v137
    %v401 = vunpack.c.l.b16 %v138
    %v402 = vunpack.c.l.b16 %v139
    %v403 = vunpack.c.l.b16 %v140
    %v404 = vunpack.c.l.b16 %v141
    %v405 = vunpack.c.l.b16 %v142
    %v406 = vunpack.c.l.b16 %v143
    %v407 = vunpack.c.l.b16 %v144
    %v408 = vunpack.c.l.b16 %v145
    %v409 = vunpack.c.l.b16 %v146
    %v410 = vunpack.c.l.b16 %v147
    %v411 = vunpack.c.l.b16 %v148
    %v412 = vunpack.c.l.b16 %v149
    %v413 = vunpack.c.l.b16 %v150
    %v414 = vunpack.c.l.b16 %v151
    %v415 = vunpack.c.l.b16 %v152
    %v416 = vunpack.c.l.b16 %v153
    %v417 = vunpack.c.l.b16 %v154
    %v418 = vunpack.c.l.b16 %v155
    %v419 = vunpack.c.l.b16 %v156
    %v420 = vunpack.c.l.b16 %v157
    %v421 = vunpack.c.l.b16 %v158
    %v422 = vunpack.c.l.b16 %v159
    %v423 = vunpack.c.l.b16 %v160
    %v424 = vunpack.c.l.b16 %v161
    %v425 = vunpack.c.l.b16 %v162
    %v426 = vunpack.c.l.b16 %v163
    %v427 = vunpack.c.l.b16 %v164
    %v428 = vunpack.c.l.b16 %v165
    %v429 = vunpack.c.l.b16 %v166
    %v430 = vunpack.c.l.b16 %v167
    %v431 = vunpack.c.l.b16 %v168
    %v432 = vunpack.c.l.b16 %v169
    %v433 = vunpack.c.l.b16 %v170
    %v434 = vunpack.c.l.b16 %v171
    %v435 = vunpack.c.l.b16 %v172
    %v436 = vunpack.c.l.b16 %v173
    %v437 = vunpack.c.l.b16 %v174
    %v438 = vunpack.c.l.b16 %v175
    %v439 = vunpack.c.l.b16 %v176
    %v440 = vunpack.c.l.b16 %v177
    %v441 = vunpack.c.l.b16 %v178
    %v442 = vunpack.c.l.b16 %v179
    %v443 = vunpack.c.l.b16 %v180
    %v444 = vunpack.c.l.b16 %v181
    %v445 = vunpack.c.l.b16 %v182
    %v446 = vunpack.c.l.b16 %v183
    %v447 = vunpack.c.l.b16 %v184
    %v448 = vunpack.c.l.b16 %v185
    %v449 = vunpack.c.l.b16 %v186
    %v450 = vunpack.c.l.b16 %v187
    %v451 = vunpack.c.l.b16 %v188
    %v452 = vunpack.c.l.b16 %v189
    %v453 = vunpack.c.l.b16 %v190
    %v454 = vunpack.c.l.b16 %v191
    %v455 = vunpack.c.l.b16 %v192
    %v456 = vunpack.c.l.b16 %v193
    %v457 = vunpack.c.l.b16 %v194
    %v458 = vunpack.c.l.b16 %v195
    %v459 = vunpack.c.l.b16 %v196
    %v460 = vunpack.c.l.b16 %v197
    %v461 = vunpack.c.l.b16 %v198
    %v462 = vunpack.c.l.b16 %v199
    %v463 = vunpack.c.l.b16 %v200
    %v464 = vunpack.c.l.b16 %v201
    %v465 = vunpack.c.l.b16 %v202
    %v466 = vunpack.c.l.b16 %v203
    %v467 = vunpack.c.l.b16 %v204
    %v468 = vunpack.c.l.b16 %v205
    %v469 = vunpack.c.l.b16 %v206
    %v470 = vunpack.c.l.b16 %v207
    %v471 = vunpack.c.l.b16 %v208
    %v472 = vunpack.c.l.b16 %v209
    %v473 = vunpack.c.l.b16 %v210
    %v474 = vunpack.c.l.b16 %v211
    %v475 = vunpack.c.l.b16 %v212
    %v476 = vunpack.c.l.b16 %v213
    %v477 = vunpack.c.l.b16 %v214
    %v478 = vunpack.c.l.b16 %v215
    %v479 = vunpack.c.l.b16 %v216
    %v480 = vpack.c.b16 %v353, %v352
    %v481 = vpack.c.b16 %v355, %v354
    %v482 = vpack.c.b16 %v357, %v356
    %v483 = vpack.c.b16 %v359, %v358
    %v484 = vpack.c.b16 %v361, %v360
    %v485 = vpack.c.b16 %v363, %v362
    %v486 = vpack.c.b16 %v365, %v364
    %v487 = vpack.c.b16 %v367, %v366
    %v488 = vpack.c.b16 %v369, %v368
    %v489 = vpack.c.b16 %v371, %v370
    %v490 = vpack.c.b16 %v373, %v372
    %v491 = vpack.c.b16 %v375, %v374
    %v492 = vpack.c.b16 %v377, %v376
    %v493 = vpack.c.b16 %v379, %v378
    %v494 = vpack.c.b16 %v381, %v380
    %v495 = vpack.c.b16 %v383, %v382
    %v496 = vpack.c.b16 %v385, %v384
    %v497 = vpack.c.b16 %v387, %v386
    %v498 = vpack.c.b16 %v389, %v388
    %v499 = vpack.c.b16 %v391, %v390
    %v500 = vpack.c.b16 %v393, %v392
    %v501 = vpack.c.b16 %v395, %v394
    %v502 = vpack.c.b16 %v397, %v396
    %v503 = vpack.c.b16 %v399, %v398
    %v504 = vpack.c.b16 %v401, %v400
    %v505 = vpack.c.b16 %v403, %v402
    %v506 = vpack.c.b16 %v405, %v404
    %v507 = vpack.c.b16 %v407, %v406
    %v508 = vpack.c.b16 %v409, %v408
    %v509 = vpack.c.b16 %v411, %v410
    %v510 = vpack.c.b16 %v413, %v412
    %v511 = vpack.c.b16 %v415, %v414
    %v512 = vpack.c.b16 %v417, %v416
    %v513 = vpack.c.b16 %v419, %v418
    %v514 = vpack.c.b16 %v421, %v420
    %v515 = vpack.c.b16 %v423, %v422
    %v516 = vpack.c.b16 %v425, %v424
    %v517 = vpack.c.b16 %v427, %v426
    %v518 = vpack.c.b16 %v429, %v428
    %v519 = vpack.c.b16 %v431, %v430
    %v520 = vpack.c.b16 %v433, %v432
    %v521 = vpack.c.b16 %v435, %v434
    %v522 = vpack.c.b16 %v437, %v436
    %v523 = vpack.c.b16 %v439, %v438
    %v524 = vpack.c.b16 %v441, %v440
    %v525 = vpack.c.b16 %v443, %v442
    %v526 = vpack.c.b16 %v445, %v444
    %v527 = vpack.c.b16 %v447, %v446
    %v528 = vpack.c.b16 %v449, %v448
    %v529 = vpack.c.b16 %v451, %v450
    %v530 = vpack.c.b16 %v453, %v452
    %v531 = vpack.c.b16 %v455, %v454
    %v532 = vpack.c.b16 %v457, %v456
    %v533 = vpack.c.b16 %v459, %v458
    %v534 = vpack.c.b16 %v461, %v460
    %v535 = vpack.c.b16 %v463, %v462
    %v536 = vpack.c.b16 %v465, %v464
    %v537 = vpack.c.b16 %v467, %v466
    %v538 = vpack.c.b16 %v469, %v468
    %v539 = vpack.c.b16 %v471, %v470
    %v540 = vpack.c.b16 %v473, %v472
    %v541 = vpack.c.b16 %v475, %v474
    %v542 = vpack.c.b16 %v477, %v476
    %v543 = vpack.c.b16 %v479, %v478
    %608 = vmatprep.subr.bf16.mxu0 0
    %609 = vmatpush1.bf16.msra.mxu0 %v487
    %610 = vmatprep.subr.bf16.mxu0 0
    %611 = vmatpush1.bf16.msra.mxu0 %v486
    %612 = vmatprep.subr.bf16.mxu0 0
    %613 = vmatpush1.bf16.msra.mxu0 %v485
    %614 = vmatprep.subr.bf16.mxu0 0
    %615 = vmatpush1.bf16.msra.mxu0 %v484
    %616 = vmatprep.subr.bf16.mxu0 0
    %617 = vmatpush1.bf16.msra.mxu0 %v483
    %618 = vmatprep.subr.bf16.mxu0 0
    %619 = vmatpush1.bf16.msra.mxu0 %v482
    %620 = vmatprep.subr.bf16.mxu0 0
    %621 = vmatpush1.bf16.msra.mxu0 %v481
    %622 = vmatprep.subr.bf16.mxu0 0
    %623 = vmatpush1.bf16.msra.mxu0 %v480
    %624 = vmatprep.subr.bf16.mxu0 0
    %625 = vmatpush2.bf16.msra.mxu0 %v495
    %626 = vmatprep.subr.bf16.mxu0 0
    %627 = vmatpush2.bf16.msra.mxu0 %v494
    %628 = vmatprep.subr.bf16.mxu0 0
    %629 = vmatpush2.bf16.msra.mxu0 %v493
    %630 = vmatprep.subr.bf16.mxu0 0
    %631 = vmatpush2.bf16.msra.mxu0 %v492
    %632 = vmatprep.subr.bf16.mxu0 0
    %633 = vmatpush2.bf16.msra.mxu0 %v491
    %634 = vmatprep.subr.bf16.mxu0 0
    %635 = vmatpush2.bf16.msra.mxu0 %v490
    %636 = vmatprep.subr.bf16.mxu0 0
    %637 = vmatpush2.bf16.msra.mxu0 %v489
    %638 = vmatprep.subr.bf16.mxu0 0
    %639 = vmatpush2.bf16.msra.mxu0 %v488
    %640 = vmatprep.mubr.bf16.mxu0 %v82
    %641 = vmatmul.mubr.bf16.gmra.mxu0 %v81
    %v642 = vpop.f32.mrf.mxu0
    %v643 = vadd.f32 %v222, %v642
    %v644 = vpop.f32.mrf.mxu0
    %v645 = vpop.f32.mrf.mxu0
    %v646 = vpop.f32.mrf.mxu0
    %647 = vdwg.mxu0
    %648 = vmatprep.subr.bf16.mxu0 0
    %649 = vmatpush1.bf16.msra.mxu0 %v503
    %650 = vmatprep.subr.bf16.mxu0 0
    %651 = vmatpush1.bf16.msra.mxu0 %v502
    %652 = vmatprep.subr.bf16.mxu0 0
    %653 = vmatpush1.bf16.msra.mxu0 %v501
    %654 = vmatprep.subr.bf16.mxu0 0
    %655 = vmatpush1.bf16.msra.mxu0 %v500
    %656 = vmatprep.subr.bf16.mxu0 0
    %657 = vmatpush1.bf16.msra.mxu0 %v499
    %658 = vmatprep.subr.bf16.mxu0 0
    %659 = vmatpush1.bf16.msra.mxu0 %v498
    %660 = vmatprep.subr.bf16.mxu0 0
    %661 = vmatpush1.bf16.msra.mxu0 %v497
    %662 = vmatprep.subr.bf16.mxu0 0
    %663 = vmatpush1.bf16.msra.mxu0 %v496
    %664 = vmatprep.subr.bf16.mxu0 0
    %665 = vmatpush2.bf16.msra.mxu0 %v511
    %666 = vmatprep.subr.bf16.mxu0 0
    %667 = vmatpush2.bf16.msra.mxu0 %v510
    %668 = vmatprep.subr.bf16.mxu0 0
    %669 = vmatpush2.bf16.msra.mxu0 %v509
    %670 = vmatprep.subr.bf16.mxu0 0
    %671 = vmatpush2.bf16.msra.mxu0 %v508
    %672 = vmatprep.subr.bf16.mxu0 0
    %673 = vmatpush2.bf16.msra.mxu0 %v507
    %674 = vmatprep.subr.bf16.mxu0 0
    %675 = vmatpush2.bf16.msra.mxu0 %v506
    %676 = vmatprep.subr.bf16.mxu0 0
    %677 = vmatpush2.bf16.msra.mxu0 %v505
    %678 = vmatprep.subr.bf16.mxu0 0
    %679 = vmatpush2.bf16.msra.mxu0 %v504
    %680 = vmatprep.mubr.bf16.mxu0 %v84
    %681 = vmatmul.mubr.bf16.gmra.mxu0 %v83
    %v682 = vpop.f32.mrf.mxu0
    %v683 = vadd.f32 %v643, %v682
    %v684 = vpop.f32.mrf.mxu0
    %v685 = vpop.f32.mrf.mxu0
    %v686 = vpop.f32.mrf.mxu0
    %687 = vdwg.mxu0
    %688 = vmatprep.subr.bf16.mxu0 0
    %689 = vmatpush1.bf16.msra.mxu0 %v519
    %690 = vmatprep.subr.bf16.mxu0 0
    %691 = vmatpush1.bf16.msra.mxu0 %v518
    %692 = vmatprep.subr.bf16.mxu0 0
    %693 = vmatpush1.bf16.msra.mxu0 %v517
    %694 = vmatprep.subr.bf16.mxu0 0
    %695 = vmatpush1.bf16.msra.mxu0 %v516
    %696 = vmatprep.subr.bf16.mxu0 0
    %697 = vmatpush1.bf16.msra.mxu0 %v515
    %698 = vmatprep.subr.bf16.mxu0 0
    %699 = vmatpush1.bf16.msra.mxu0 %v514
    %700 = vmatprep.subr.bf16.mxu0 0
    %701 = vmatpush1.bf16.msra.mxu0 %v513
    %702 = vmatprep.subr.bf16.mxu0 0
    %703 = vmatpush1.bf16.msra.mxu0 %v512
    %704 = vmatprep.subr.bf16.mxu0 0
    %705 = vmatpush2.bf16.msra.mxu0 %v527
    %706 = vmatprep.subr.bf16.mxu0 0
    %707 = vmatpush2.bf16.msra.mxu0 %v526
    %708 = vmatprep.subr.bf16.mxu0 0
    %709 = vmatpush2.bf16.msra.mxu0 %v525
    %710 = vmatprep.subr.bf16.mxu0 0
    %711 = vmatpush2.bf16.msra.mxu0 %v524
    %712 = vmatprep.subr.bf16.mxu0 0
    %713 = vmatpush2.bf16.msra.mxu0 %v523
    %714 = vmatprep.subr.bf16.mxu0 0
    %715 = vmatpush2.bf16.msra.mxu0 %v522
    %716 = vmatprep.subr.bf16.mxu0 0
    %717 = vmatpush2.bf16.msra.mxu0 %v521
    %718 = vmatprep.subr.bf16.mxu0 0
    %719 = vmatpush2.bf16.msra.mxu0 %v520
    %720 = vmatprep.mubr.bf16.mxu0 %v86
    %721 = vmatmul.mubr.bf16.gmra.mxu0 %v85
    %v722 = vpop.f32.mrf.mxu0
    %v723 = vadd.f32 %v683, %v722
    %v724 = vpop.f32.mrf.mxu0
    %v725 = vpop.f32.mrf.mxu0
    %v726 = vpop.f32.mrf.mxu0
    %727 = vdwg.mxu0
    %728 = vmatprep.subr.bf16.mxu0 0
    %729 = vmatpush1.bf16.msra.mxu0 %v535
    %730 = vmatprep.subr.bf16.mxu0 0
    %731 = vmatpush1.bf16.msra.mxu0 %v534
    %732 = vmatprep.subr.bf16.mxu0 0
    %733 = vmatpush1.bf16.msra.mxu0 %v533
    %734 = vmatprep.subr.bf16.mxu0 0
    %735 = vmatpush1.bf16.msra.mxu0 %v532
    %736 = vmatprep.subr.bf16.mxu0 0
    %737 = vmatpush1.bf16.msra.mxu0 %v531
    %738 = vmatprep.subr.bf16.mxu0 0
    %739 = vmatpush1.bf16.msra.mxu0 %v530
    %740 = vmatprep.subr.bf16.mxu0 0
    %741 = vmatpush1.bf16.msra.mxu0 %v529
    %742 = vmatprep.subr.bf16.mxu0 0
    %743 = vmatpush1.bf16.msra.mxu0 %v528
    %744 = vmatprep.subr.bf16.mxu0 0
    %745 = vmatpush2.bf16.msra.mxu0 %v543
    %746 = vmatprep.subr.bf16.mxu0 0
    %747 = vmatpush2.bf16.msra.mxu0 %v542
    %748 = vmatprep.subr.bf16.mxu0 0
    %749 = vmatpush2.bf16.msra.mxu0 %v541
    %750 = vmatprep.subr.bf16.mxu0 0
    %751 = vmatpush2.bf16.msra.mxu0 %v540
    %752 = vmatprep.subr.bf16.mxu0 0
    %753 = vmatpush2.bf16.msra.mxu0 %v539
    %754 = vmatprep.subr.bf16.mxu0 0
    %755 = vmatpush2.bf16.msra.mxu0 %v538
    %756 = vmatprep.subr.bf16.mxu0 0
    %757 = vmatpush2.bf16.msra.mxu0 %v537
    %758 = vmatprep.subr.bf16.mxu0 0
    %759 = vmatpush2.bf16.msra.mxu0 %v536
    %760 = vmatprep.mubr.bf16.mxu0 %v88
    %761 = vmatmul.mubr.bf16.gmra.mxu0 %v87
    %v762 = vpop.f32.mrf.mxu0
    %v763 = vadd.f32 %v723, %v762
    %v764 = vpop.f32.mrf.mxu0
    %v765 = vpop.f32.mrf.mxu0
    %v766 = vpop.f32.mrf.mxu0
    %767 = vdwg.mxu0
    %v768 = vmax.f32 %v763, 0.0
    %v769 = vpack.c.bf16 %v768, %v768
    %v770 = vld [vmem:[#allocation7] sm:$0xff]
    %v771 = vld [vmem:[#allocation7 + $0x8] sm:$0xff]
    %v772 = vld [vmem:[#allocation7 + $0x10] sm:$0xff]
    %v773 = vld [vmem:[#allocation7 + $0x18] sm:$0xff]
    %v774 = vld [vmem:[#allocation7 + $0x20] sm:$0xff]
    %v775 = vld [vmem:[#allocation7 + $0x28] sm:$0xff]
    %v776 = vld [vmem:[#allocation7 + $0x30] sm:$0xff]
    %v777 = vld [vmem:[#allocation7 + $0x38] sm:$0xff]
    %v778 = vld [vmem:[#allocation7 + $0x40] sm:$0xff]
    %v779 = vld [vmem:[#allocation7 + $0x48] sm:$0xff]
    %v780 = vld [vmem:[#allocation7 + $0x50] sm:$0xff]
    %v781 = vld [vmem:[#allocation7 + $0x58] sm:$0xff]
    %v782 = vld [vmem:[#allocation7 + $0x60] sm:$0xff]
    %v783 = vld [vmem:[#allocation7 + $0x68] sm:$0xff]
    %v784 = vld [vmem:[#allocation7 + $0x70] sm:$0xff]
    %v785 = vld [vmem:[#allocation7 + $0x78] sm:$0xff]
    %v786 = vld [vmem:[#allocation7 + $0x80] sm:$0xff]
    %v787 = vld [vmem:[#allocation7 + $0x88] sm:$0xff]
    %v788 = vld [vmem:[#allocation7 + $0x90] sm:$0xff]
    %v789 = vld [vmem:[#allocation7 + $0x98] sm:$0xff]
    %v790 = vld [vmem:[#allocation7 + $0xa0] sm:$0xff]
    %v791 = vld [vmem:[#allocation7 + $0xa8] sm:$0xff]
    %v792 = vld [vmem:[#allocation7 + $0xb0] sm:$0xff]
    %v793 = vld [vmem:[#allocation7 + $0xb8] sm:$0xff]
    %v794 = vld [vmem:[#allocation7 + $0xc0] sm:$0xff]
    %v795 = vld [vmem:[#allocation7 + $0xc8] sm:$0xff]
    %v796 = vld [vmem:[#allocation7 + $0xd0] sm:$0xff]
    %v797 = vld [vmem:[#allocation7 + $0xd8] sm:$0xff]
    %v798 = vld [vmem:[#allocation7 + $0xe0] sm:$0xff]
    %v799 = vld [vmem:[#allocation7 + $0xe8] sm:$0xff]
    %v800 = vld [vmem:[#allocation7 + $0xf0] sm:$0xff]
    %v801 = vld [vmem:[#allocation7 + $0xf8] sm:$0xff]
    %v802 = vld [vmem:[#allocation7 + $0x100] sm:$0xff]
    %v803 = vld [vmem:[#allocation7 + $0x108] sm:$0xff]
    %v804 = vld [vmem:[#allocation7 + $0x110] sm:$0xff]
    %v805 = vld [vmem:[#allocation7 + $0x118] sm:$0xff]
    %v806 = vld [vmem:[#allocation7 + $0x120] sm:$0xff]
    %v807 = vld [vmem:[#allocation7 + $0x128] sm:$0xff]
    %v808 = vld [vmem:[#allocation7 + $0x130] sm:$0xff]
    %v809 = vld [vmem:[#allocation7 + $0x138] sm:$0xff]
    %v810 = vld [vmem:[#allocation7 + $0x140] sm:$0xff]
    %v811 = vld [vmem:[#allocation7 + $0x148] sm:$0xff]
    %v812 = vld [vmem:[#allocation7 + $0x150] sm:$0xff]
    %v813 = vld [vmem:[#allocation7 + $0x158] sm:$0xff]
    %v814 = vld [vmem:[#allocation7 + $0x160] sm:$0xff]
    %v815 = vld [vmem:[#allocation7 + $0x168] sm:$0xff]
    %v816 = vld [vmem:[#allocation7 + $0x170] sm:$0xff]
    %v817 = vld [vmem:[#allocation7 + $0x178] sm:$0xff]
    %v818 = vld [vmem:[#allocation7 + $0x180] sm:$0xff]
    %v819 = vld [vmem:[#allocation7 + $0x188] sm:$0xff]
    %v820 = vld [vmem:[#allocation7 + $0x190] sm:$0xff]
    %v821 = vld [vmem:[#allocation7 + $0x198] sm:$0xff]
    %v822 = vld [vmem:[#allocation7 + $0x1a0] sm:$0xff]
    %v823 = vld [vmem:[#allocation7 + $0x1a8] sm:$0xff]
    %v824 = vld [vmem:[#allocation7 + $0x1b0] sm:$0xff]
    %v825 = vld [vmem:[#allocation7 + $0x1b8] sm:$0xff]
    %v826 = vld [vmem:[#allocation7 + $0x1c0] sm:$0xff]
    %v827 = vld [vmem:[#allocation7 + $0x1c8] sm:$0xff]
    %v828 = vld [vmem:[#allocation7 + $0x1d0] sm:$0xff]
    %v829 = vld [vmem:[#allocation7 + $0x1d8] sm:$0xff]
    %v830 = vld [vmem:[#allocation7 + $0x1e0] sm:$0xff]
    %v831 = vld [vmem:[#allocation7 + $0x1e8] sm:$0xff]
    %v832 = vld [vmem:[#allocation7 + $0x1f0] sm:$0xff]
    %v833 = vld [vmem:[#allocation7 + $0x1f8] sm:$0xff]
    %v834 = vld [vmem:[#allocation8] sm:$0xff]
    %v836 = vlaneseq
    %v837 = vshrl.u32 %v836, 7
    %v838 = vsub.s32 0, %v837
    %v839 = vrot.slane %v834, %v838
    %v840 = vlaneseq
    %v841 = vshrl.u32 %v840, 7
    %v842 = vsub.s32 1, %v841
    %v843 = vrot.slane %v834, %v842
    %v844 = vlaneseq
    %v845 = vshrl.u32 %v844, 7
    %v846 = vsub.s32 2, %v845
    %v847 = vrot.slane %v834, %v846
    %v848 = vlaneseq
    %v849 = vshrl.u32 %v848, 7
    %v850 = vsub.s32 3, %v849
    %v851 = vrot.slane %v834, %v850
    %v852 = vlaneseq
    %v853 = vshrl.u32 %v852, 7
    %v854 = vsub.s32 4, %v853
    %v855 = vrot.slane %v834, %v854
    %v856 = vlaneseq
    %v857 = vshrl.u32 %v856, 7
    %v858 = vsub.s32 5, %v857
    %v859 = vrot.slane %v834, %v858
    %v860 = vlaneseq
    %v861 = vshrl.u32 %v860, 7
    %v862 = vsub.s32 6, %v861
    %v863 = vrot.slane %v834, %v862
    %v864 = vlaneseq
    %v865 = vshrl.u32 %v864, 7
    %v866 = vsub.s32 7, %v865
    %v867 = vrot.slane %v834, %v866
    %v940 = vunpack.c.l.b16 %v770
    %v941 = vunpack.c.h.b16 %v770
    %v942 = vunpack.c.l.b16 %v771
    %v943 = vunpack.c.h.b16 %v771
    %v944 = vunpack.c.l.b16 %v772
    %v945 = vunpack.c.h.b16 %v772
    %v946 = vunpack.c.l.b16 %v773
    %v947 = vunpack.c.h.b16 %v773
    %v948 = vunpack.c.l.b16 %v774
    %v949 = vunpack.c.h.b16 %v774
    %v950 = vunpack.c.l.b16 %v775
    %v951 = vunpack.c.h.b16 %v775
    %v952 = vunpack.c.l.b16 %v776
    %v953 = vunpack.c.h.b16 %v776
    %v954 = vunpack.c.l.b16 %v777
    %v955 = vunpack.c.h.b16 %v777
    %v956 = vunpack.c.l.b16 %v778
    %v957 = vunpack.c.h.b16 %v778
    %v958 = vunpack.c.l.b16 %v779
    %v959 = vunpack.c.h.b16 %v779
    %v960 = vunpack.c.l.b16 %v780
    %v961 = vunpack.c.h.b16 %v780
    %v962 = vunpack.c.l.b16 %v781
    %v963 = vunpack.c.h.b16 %v781
    %v964 = vunpack.c.l.b16 %v782
    %v965 = vunpack.c.h.b16 %v782
    %v966 = vunpack.c.l.b16 %v783
    %v967 = vunpack.c.h.b16 %v783
    %v968 = vunpack.c.l.b16 %v784
    %v969 = vunpack.c.h.b16 %v784
    %v970 = vunpack.c.l.b16 %v785
    %v971 = vunpack.c.h.b16 %v785
    %v972 = vunpack.c.l.b16 %v786
    %v973 = vunpack.c.h.b16 %v786
    %v974 = vunpack.c.l.b16 %v787
    %v975 = vunpack.c.h.b16 %v787
    %v976 = vunpack.c.l.b16 %v788
    %v977 = vunpack.c.h.b16 %v788
    %v978 = vunpack.c.l.b16 %v789
    %v979 = vunpack.c.h.b16 %v789
    %v980 = vunpack.c.l.b16 %v790
    %v981 = vunpack.c.h.b16 %v790
    %v982 = vunpack.c.l.b16 %v791
    %v983 = vunpack.c.h.b16 %v791
    %v984 = vunpack.c.l.b16 %v792
    %v985 = vunpack.c.h.b16 %v792
    %v986 = vunpack.c.l.b16 %v793
    %v987 = vunpack.c.h.b16 %v793
    %v988 = vunpack.c.l.b16 %v794
    %v989 = vunpack.c.h.b16 %v794
    %v990 = vunpack.c.l.b16 %v795
    %v991 = vunpack.c.h.b16 %v795
    %v992 = vunpack.c.l.b16 %v796
    %v993 = vunpack.c.h.b16 %v796
    %v994 = vunpack.c.l.b16 %v797
    %v995 = vunpack.c.h.b16 %v797
    %v996 = vunpack.c.l.b16 %v798
    %v997 = vunpack.c.h.b16 %v798
    %v998 = vunpack.c.l.b16 %v799
    %v999 = vunpack.c.h.b16 %v799
    %v1000 = vunpack.c.l.b16 %v800
    %v1001 = vunpack.c.h.b16 %v800
    %v1002 = vunpack.c.l.b16 %v801
    %v1003 = vunpack.c.h.b16 %v801
    %v1004 = vunpack.c.l.b16 %v802
    %v1005 = vunpack.c.h.b16 %v802
    %v1006 = vunpack.c.l.b16 %v803
    %v1007 = vunpack.c.h.b16 %v803
    %v1008 = vunpack.c.l.b16 %v804
    %v1009 = vunpack.c.h.b16 %v804
    %v1010 = vunpack.c.l.b16 %v805
    %v1011 = vunpack.c.h.b16 %v805
    %v1012 = vunpack.c.l.b16 %v806
    %v1013 = vunpack.c.h.b16 %v806
    %v1014 = vunpack.c.l.b16 %v807
    %v1015 = vunpack.c.h.b16 %v807
    %v1016 = vunpack.c.l.b16 %v808
    %v1017 = vunpack.c.h.b16 %v808
    %v1018 = vunpack.c.l.b16 %v809
    %v1019 = vunpack.c.h.b16 %v809
    %v1020 = vunpack.c.l.b16 %v810
    %v1021 = vunpack.c.h.b16 %v810
    %v1022 = vunpack.c.l.b16 %v811
    %v1023 = vunpack.c.h.b16 %v811
    %v1024 = vunpack.c.l.b16 %v812
    %v1025 = vunpack.c.h.b16 %v812
    %v1026 = vunpack.c.l.b16 %v813
    %v1027 = vunpack.c.h.b16 %v813
    %v1028 = vunpack.c.l.b16 %v814
    %v1029 = vunpack.c.h.b16 %v814
    %v1030 = vunpack.c.l.b16 %v815
    %v1031 = vunpack.c.h.b16 %v815
    %v1032 = vunpack.c.l.b16 %v816
    %v1033 = vunpack.c.h.b16 %v816
    %v1034 = vunpack.c.l.b16 %v817
    %v1035 = vunpack.c.h.b16 %v817
    %v1036 = vunpack.c.l.b16 %v818
    %v1037 = vunpack.c.h.b16 %v818
    %v1038 = vunpack.c.l.b16 %v819
    %v1039 = vunpack.c.h.b16 %v819
    %v1040 = vunpack.c.l.b16 %v820
    %v1041 = vunpack.c.h.b16 %v820
    %v1042 = vunpack.c.l.b16 %v821
    %v1043 = vunpack.c.h.b16 %v821
    %v1044 = vunpack.c.l.b16 %v822
    %v1045 = vunpack.c.h.b16 %v822
    %v1046 = vunpack.c.l.b16 %v823
    %v1047 = vunpack.c.h.b16 %v823
    %v1048 = vunpack.c.l.b16 %v824
    %v1049 = vunpack.c.h.b16 %v824
    %v1050 = vunpack.c.l.b16 %v825
    %v1051 = vunpack.c.h.b16 %v825
    %v1052 = vunpack.c.l.b16 %v826
    %v1053 = vunpack.c.h.b16 %v826
    %v1054 = vunpack.c.l.b16 %v827
    %v1055 = vunpack.c.h.b16 %v827
    %v1056 = vunpack.c.l.b16 %v828
    %v1057 = vunpack.c.h.b16 %v828
    %v1058 = vunpack.c.l.b16 %v829
    %v1059 = vunpack.c.h.b16 %v829
    %v1060 = vunpack.c.l.b16 %v830
    %v1061 = vunpack.c.h.b16 %v830
    %v1062 = vunpack.c.l.b16 %v831
    %v1063 = vunpack.c.h.b16 %v831
    %v1064 = vunpack.c.l.b16 %v832
    %v1065 = vunpack.c.h.b16 %v832
    %v1066 = vunpack.c.l.b16 %v833
    %v1067 = vunpack.c.h.b16 %v833
    %v1068 = vpack.c.b16 %v948, %v940
    %v1069 = vpack.c.b16 %v949, %v941
    %v1070 = vpack.c.b16 %v950, %v942
    %v1071 = vpack.c.b16 %v951, %v943
    %v1072 = vpack.c.b16 %v952, %v944
    %v1073 = vpack.c.b16 %v953, %v945
    %v1074 = vpack.c.b16 %v954, %v946
    %v1075 = vpack.c.b16 %v955, %v947
    %v1076 = vpack.c.b16 %v964, %v956
    %v1077 = vpack.c.b16 %v965, %v957
    %v1078 = vpack.c.b16 %v966, %v958
    %v1079 = vpack.c.b16 %v967, %v959
    %v1080 = vpack.c.b16 %v968, %v960
    %v1081 = vpack.c.b16 %v969, %v961
    %v1082 = vpack.c.b16 %v970, %v962
    %v1083 = vpack.c.b16 %v971, %v963
    %v1084 = vpack.c.b16 %v980, %v972
    %v1085 = vpack.c.b16 %v981, %v973
    %v1086 = vpack.c.b16 %v982, %v974
    %v1087 = vpack.c.b16 %v983, %v975
    %v1088 = vpack.c.b16 %v984, %v976
    %v1089 = vpack.c.b16 %v985, %v977
    %v1090 = vpack.c.b16 %v986, %v978
    %v1091 = vpack.c.b16 %v987, %v979
    %v1092 = vpack.c.b16 %v996, %v988
    %v1093 = vpack.c.b16 %v997, %v989
    %v1094 = vpack.c.b16 %v998, %v990
    %v1095 = vpack.c.b16 %v999, %v991
    %v1096 = vpack.c.b16 %v1000, %v992
    %v1097 = vpack.c.b16 %v1001, %v993
    %v1098 = vpack.c.b16 %v1002, %v994
    %v1099 = vpack.c.b16 %v1003, %v995
    %v1100 = vpack.c.b16 %v1012, %v1004
    %v1101 = vpack.c.b16 %v1013, %v1005
    %v1102 = vpack.c.b16 %v1014, %v1006
    %v1103 = vpack.c.b16 %v1015, %v1007
    %v1104 = vpack.c.b16 %v1016, %v1008
    %v1105 = vpack.c.b16 %v1017, %v1009
    %v1106 = vpack.c.b16 %v1018, %v1010
    %v1107 = vpack.c.b16 %v1019, %v1011
    %v1108 = vpack.c.b16 %v1028, %v1020
    %v1109 = vpack.c.b16 %v1029, %v1021
    %v1110 = vpack.c.b16 %v1030, %v1022
    %v1111 = vpack.c.b16 %v1031, %v1023
    %v1112 = vpack.c.b16 %v1032, %v1024
    %v1113 = vpack.c.b16 %v1033, %v1025
    %v1114 = vpack.c.b16 %v1034, %v1026
    %v1115 = vpack.c.b16 %v1035, %v1027
    %v1116 = vpack.c.b16 %v1044, %v1036
    %v1117 = vpack.c.b16 %v1045, %v1037
    %v1118 = vpack.c.b16 %v1046, %v1038
    %v1119 = vpack.c.b16 %v1047, %v1039
    %v1120 = vpack.c.b16 %v1048, %v1040
    %v1121 = vpack.c.b16 %v1049, %v1041
    %v1122 = vpack.c.b16 %v1050, %v1042
    %v1123 = vpack.c.b16 %v1051, %v1043
    %v1124 = vpack.c.b16 %v1060, %v1052
    %v1125 = vpack.c.b16 %v1061, %v1053
    %v1126 = vpack.c.b16 %v1062, %v1054
    %v1127 = vpack.c.b16 %v1063, %v1055
    %v1128 = vpack.c.b16 %v1064, %v1056
    %v1129 = vpack.c.b16 %v1065, %v1057
    %v1130 = vpack.c.b16 %v1066, %v1058
    %v1131 = vpack.c.b16 %v1067, %v1059
    %1196 = vmatprep.subr.bf16.mxu0 %v1125
    %1197 = vmatpush1.bf16.msra.mxu0 %v1124
    %1198 = vmatprep.subr.bf16.mxu0 %v1117
    %1199 = vmatpush1.bf16.msra.mxu0 %v1116
    %1200 = vmatprep.subr.bf16.mxu0 %v1109
    %1201 = vmatpush1.bf16.msra.mxu0 %v1108
    %1202 = vmatprep.subr.bf16.mxu0 %v1101
    %1203 = vmatpush1.bf16.msra.mxu0 %v1100
    %1204 = vmatprep.subr.bf16.mxu0 %v1093
    %1205 = vmatpush1.bf16.msra.mxu0 %v1092
    %1206 = vmatprep.subr.bf16.mxu0 %v1085
    %1207 = vmatpush1.bf16.msra.mxu0 %v1084
    %1208 = vmatprep.subr.bf16.mxu0 %v1077
    %1209 = vmatpush1.bf16.msra.mxu0 %v1076
    %1210 = vmatprep.subr.bf16.mxu0 %v1069
    %1211 = vmatpush1.bf16.msra.mxu0 %v1068
    %1212 = vmatprep.subr.bf16.mxu0 0
    %1213 = vmatpush2.bf16.msra.mxu0 0
    %1214 = vmatprep.subr.bf16.mxu0 0
    %1215 = vmatpush2.bf16.msra.mxu0 0
    %1216 = vmatprep.subr.bf16.mxu0 0
    %1217 = vmatpush2.bf16.msra.mxu0 0
    %1218 = vmatprep.subr.bf16.mxu0 0
    %1219 = vmatpush2.bf16.msra.mxu0 0
    %1220 = vmatprep.subr.bf16.mxu0 0
    %1221 = vmatpush2.bf16.msra.mxu0 0
    %1222 = vmatprep.subr.bf16.mxu0 0
    %1223 = vmatpush2.bf16.msra.mxu0 0
    %1224 = vmatprep.subr.bf16.mxu0 0
    %1225 = vmatpush2.bf16.msra.mxu0 0
    %1226 = vmatprep.subr.bf16.mxu0 0
    %1227 = vmatpush2.bf16.msra.mxu0 0
    %1228 = vmatprep.mubr.bf16.mxu0 0
    %1229 = vmatmul.mubr.bf16.gmra.mxu0 %v769
    %v1230 = vpop.f32.mrf.mxu0
    %v1231 = vadd.f32 %v839, %v1230
    %v1232 = vpop.f32.mrf.mxu0
    %v1233 = vadd.f32 %v843, %v1232
    %v1234 = vpop.f32.mrf.mxu0
    %v1235 = vpop.f32.mrf.mxu0
    %1236 = vdwg.mxu0
    %1237 = vmatprep.subr.bf16.mxu0 %v1127
    %1238 = vmatpush1.bf16.msra.mxu0 %v1126
    %1239 = vmatprep.subr.bf16.mxu0 %v1119
    %1240 = vmatpush1.bf16.msra.mxu0 %v1118
    %1241 = vmatprep.subr.bf16.mxu0 %v1111
    %1242 = vmatpush1.bf16.msra.mxu0 %v1110
    %1243 = vmatprep.subr.bf16.mxu0 %v1103
    %1244 = vmatpush1.bf16.msra.mxu0 %v1102
    %1245 = vmatprep.subr.bf16.mxu0 %v1095
    %1246 = vmatpush1.bf16.msra.mxu0 %v1094
    %1247 = vmatprep.subr.bf16.mxu0 %v1087
    %1248 = vmatpush1.bf16.msra.mxu0 %v1086
    %1249 = vmatprep.subr.bf16.mxu0 %v1079
    %1250 = vmatpush1.bf16.msra.mxu0 %v1078
    %1251 = vmatprep.subr.bf16.mxu0 %v1071
    %1252 = vmatpush1.bf16.msra.mxu0 %v1070
    %1253 = vmatprep.subr.bf16.mxu0 0
    %1254 = vmatpush2.bf16.msra.mxu0 0
    %1255 = vmatprep.subr.bf16.mxu0 0
    %1256 = vmatpush2.bf16.msra.mxu0 0
    %1257 = vmatprep.subr.bf16.mxu0 0
    %1258 = vmatpush2.bf16.msra.mxu0 0
    %1259 = vmatprep.subr.bf16.mxu0 0
    %1260 = vmatpush2.bf16.msra.mxu0 0
    %1261 = vmatprep.subr.bf16.mxu0 0
    %1262 = vmatpush2.bf16.msra.mxu0 0
    %1263 = vmatprep.subr.bf16.mxu0 0
    %1264 = vmatpush2.bf16.msra.mxu0 0
    %1265 = vmatprep.subr.bf16.mxu0 0
    %1266 = vmatpush2.bf16.msra.mxu0 0
    %1267 = vmatprep.subr.bf16.mxu0 0
    %1268 = vmatpush2.bf16.msra.mxu0 0
    %1269 = vmatprep.mubr.bf16.mxu0 0
    %1270 = vmatmul.mubr.bf16.gmra.mxu0 %v769
    %v1271 = vpop.f32.mrf.mxu0
    %v1272 = vadd.f32 %v847, %v1271
    %v1273 = vpop.f32.mrf.mxu0
    %v1274 = vadd.f32 %v851, %v1273
    %v1275 = vpop.f32.mrf.mxu0
    %v1276 = vpop.f32.mrf.mxu0
    %1277 = vdwg.mxu0
    %1278 = vmatprep.subr.bf16.mxu0 %v1129
    %1279 = vmatpush1.bf16.msra.mxu0 %v1128
    %1280 = vmatprep.subr.bf16.mxu0 %v1121
    %1281 = vmatpush1.bf16.msra.mxu0 %v1120
    %1282 = vmatprep.subr.bf16.mxu0 %v1113
    %1283 = vmatpush1.bf16.msra.mxu0 %v1112
    %1284 = vmatprep.subr.bf16.mxu0 %v1105
    %1285 = vmatpush1.bf16.msra.mxu0 %v1104
    %1286 = vmatprep.subr.bf16.mxu0 %v1097
    %1287 = vmatpush1.bf16.msra.mxu0 %v1096
    %1288 = vmatprep.subr.bf16.mxu0 %v1089
    %1289 = vmatpush1.bf16.msra.mxu0 %v1088
    %1290 = vmatprep.subr.bf16.mxu0 %v1081
    %1291 = vmatpush1.bf16.msra.mxu0 %v1080
    %1292 = vmatprep.subr.bf16.mxu0 %v1073
    %1293 = vmatpush1.bf16.msra.mxu0 %v1072
    %1294 = vmatprep.subr.bf16.mxu0 0
    %1295 = vmatpush2.bf16.msra.mxu0 0
    %1296 = vmatprep.subr.bf16.mxu0 0
    %1297 = vmatpush2.bf16.msra.mxu0 0
    %1298 = vmatprep.subr.bf16.mxu0 0
    %1299 = vmatpush2.bf16.msra.mxu0 0
    %1300 = vmatprep.subr.bf16.mxu0 0
    %1301 = vmatpush2.bf16.msra.mxu0 0
    %1302 = vmatprep.subr.bf16.mxu0 0
    %1303 = vmatpush2.bf16.msra.mxu0 0
    %1304 = vmatprep.subr.bf16.mxu0 0
    %1305 = vmatpush2.bf16.msra.mxu0 0
    %1306 = vmatprep.subr.bf16.mxu0 0
    %1307 = vmatpush2.bf16.msra.mxu0 0
    %1308 = vmatprep.subr.bf16.mxu0 0
    %1309 = vmatpush2.bf16.msra.mxu0 0
    %1310 = vmatprep.mubr.bf16.mxu0 0
    %1311 = vmatmul.mubr.bf16.gmra.mxu0 %v769
    %v1312 = vpop.f32.mrf.mxu0
    %v1313 = vadd.f32 %v855, %v1312
    %v1314 = vpop.f32.mrf.mxu0
    %v1315 = vadd.f32 %v859, %v1314
    %v1316 = vpop.f32.mrf.mxu0
    %v1317 = vpop.f32.mrf.mxu0
    %1318 = vdwg.mxu0
    %1319 = vmatprep.subr.bf16.mxu0 %v1131
    %1320 = vmatpush1.bf16.msra.mxu0 %v1130
    %1321 = vmatprep.subr.bf16.mxu0 %v1123
    %1322 = vmatpush1.bf16.msra.mxu0 %v1122
    %1323 = vmatprep.subr.bf16.mxu0 %v1115
    %1324 = vmatpush1.bf16.msra.mxu0 %v1114
    %1325 = vmatprep.subr.bf16.mxu0 %v1107
    %1326 = vmatpush1.bf16.msra.mxu0 %v1106
    %1327 = vmatprep.subr.bf16.mxu0 %v1099
    %1328 = vmatpush1.bf16.msra.mxu0 %v1098
    %1329 = vmatprep.subr.bf16.mxu0 %v1091
    %1330 = vmatpush1.bf16.msra.mxu0 %v1090
    %1331 = vmatprep.subr.bf16.mxu0 %v1083
    %1332 = vmatpush1.bf16.msra.mxu0 %v1082
    %1333 = vmatprep.subr.bf16.mxu0 %v1075
    %1334 = vmatpush1.bf16.msra.mxu0 %v1074
    %1335 = vmatprep.subr.bf16.mxu0 0
    %1336 = vmatpush2.bf16.msra.mxu0 0
    %1337 = vmatprep.subr.bf16.mxu0 0
    %1338 = vmatpush2.bf16.msra.mxu0 0
    %1339 = vmatprep.subr.bf16.mxu0 0
    %1340 = vmatpush2.bf16.msra.mxu0 0
    %1341 = vmatprep.subr.bf16.mxu0 0
    %1342 = vmatpush2.bf16.msra.mxu0 0
    %1343 = vmatprep.subr.bf16.mxu0 0
    %1344 = vmatpush2.bf16.msra.mxu0 0
    %1345 = vmatprep.subr.bf16.mxu0 0
    %1346 = vmatpush2.bf16.msra.mxu0 0
    %1347 = vmatprep.subr.bf16.mxu0 0
    %1348 = vmatpush2.bf16.msra.mxu0 0
    %1349 = vmatprep.subr.bf16.mxu0 0
    %1350 = vmatpush2.bf16.msra.mxu0 0
    %1351 = vmatprep.mubr.bf16.mxu0 0
    %1352 = vmatmul.mubr.bf16.gmra.mxu0 %v769
    %v1353 = vpop.f32.mrf.mxu0
    %v1354 = vadd.f32 %v863, %v1353
    %v1355 = vpop.f32.mrf.mxu0
    %v1356 = vadd.f32 %v867, %v1355
    %v1357 = vpop.f32.mrf.mxu0
    %v1358 = vpop.f32.mrf.mxu0
    %1359 = vdwg.mxu0
    %v1360 = vpack.c.bf16 %v1231, %v1231
    %v1361 = vpack.c.bf16 %v1233, %v1233
    %v1362 = vpack.c.bf16 %v1272, %v1272
    %v1363 = vpack.c.bf16 %v1274, %v1274
    %v1364 = vpack.c.bf16 %v1313, %v1313
    %v1365 = vpack.c.bf16 %v1315, %v1315
    %v1366 = vpack.c.bf16 %v1354, %v1354
    %v1367 = vpack.c.bf16 %v1356, %v1356
    %v1376 = vunpack.c.l.b16 %v1360
    %v1377 = vunpack.c.l.b16 %v1361
    %v1378 = vunpack.c.l.b16 %v1362
    %v1379 = vunpack.c.l.b16 %v1363
    %v1380 = vunpack.c.l.b16 %v1364
    %v1381 = vunpack.c.l.b16 %v1365
    %v1382 = vunpack.c.l.b16 %v1366
    %v1383 = vunpack.c.l.b16 %v1367
    %v1384 = vpack.c.b16 %v1377, %v1376
    %v1385 = vpack.c.b16 %v1379, %v1378
    %v1386 = vpack.c.b16 %v1381, %v1380
    %v1387 = vpack.c.b16 %v1383, %v1382
    %1392 = vst [vmem:[#allocation10] sm:$0xff] %v1384
    %1393 = vst [vmem:[#allocation10 + $0x8] sm:$0xff] %v1385
    %1394 = vst [vmem:[#allocation10 + $0x10] sm:$0xff] %v1386
    %1395 = vst [vmem:[#allocation10 + $0x18] sm:$0xff] %v1387
    // Predicated region
    $region38: #{tpu_custom_call.1} parent=1 // pred_check
      _
    $region39: #{tpu_custom_call.1} parent=1 // pred_check_branch
      %1397 = sbr.rel (0) target = $region41
    $region40: #{tpu_custom_call.1} parent=1 // pred_region
      %s1399 = ssub.s32 512, 512
      %1400 = vsyncadd [#allocation4], %s1399
      %s1402 = sshll.u32 [#allocation10], 4
      %s1403 = int_to_ptr.vmem [resolvable:$true] %s1402
      %1405 = dma.vmem_to_hbm [thread:$0]  %s1403, 512, %s5, [#allocation4]
    $region41: #{tpu_custom_call.1} parent=1 // pred_fallthru
      _
    // Predicated region
    $region42: #{tpu_custom_call.1} parent=1 // pred_check
      _
    $region43: #{tpu_custom_call.1} parent=1 // pred_check_branch
      %1407 = sbr.rel (0) target = $region45
    $region44: #{tpu_custom_call.1} parent=1 // pred_region
      %1408 = dma.done [#allocation4], 512
    $region45: #{tpu_custom_call.1} parent=1 // pred_fallthru
      _
    %1409 = vsyncpa [#allocation3], 1
    %1410 = vsyncpa [#allocation6], 1
    %1411 = vsyncpa [#allocation9], 1
    %1412 = vsyncpa [#allocation4], 1

</llo_original>
